<compile_context>
chip_gen: v7x
topology: tpu7x:2x2x1
jax: 0.10.0
libtpu: 0.0.40
codegen_flags: <defaults>
</compile_context>

<pallas_src>
import jax
import jax.numpy as jnp
import numpy as np
from jax import lax
from jax.experimental import pallas as pl
from jax.experimental.pallas import tpu as pltpu

_CHUNK = 8          # sublane tile: 8 timesteps per statically-unrolled block
_NEG_BIG = -1e30    # bias for padded output lanes -> softmax prob exactly 0


def _rds_policy_kernel(x_ref, wih_t_ref, whh_t_ref, bih_ref, bhn_ref,
                       wlin_t_ref, blin_ref, out_ref, gx_ref):
    """x:[S,I]  wih_t:[I,3H]  whh_t:[H,3H]  bih:[1,3H] (b_hh r/z folded in)
       bhn:[1,H]  wlin_t:[H,OP]  blin:[1,OP] (padded lanes = -1e30)
       out:[S,OP]  gx(scratch):[S,3H].   S is a multiple of 8."""
    H = whh_t_ref.shape[0]
    S = x_ref.shape[0]
    n_chunks = S // _CHUNK

    # Input-side gate pre-activations for every timestep in one MXU matmul.
    # bih already contains b_ir+b_hr | b_iz+b_hz | b_in.
    gx_ref[...] = (
        jnp.dot(x_ref[...], wih_t_ref[...], preferred_element_type=jnp.float32)
        + bih_ref[...]
    )

    # Keep loop-invariant operands resident in vregs across the recurrence.
    whh = whh_t_ref[...]          # (H, 3H)
    bhn = bhn_ref[...]            # (1, H)
    wlin = wlin_t_ref[...]        # (H, OP)
    blin = blin_ref[...]          # (1, OP)

    def chunk_body(c, h):
        base = pl.multiple_of(c * _CHUNK, _CHUNK)
        gx_blk = gx_ref[pl.ds(base, _CHUNK), :]          # (8, 3H), unmasked vld

        hs_rows = []
        # Statically unrolled 8-step recurrence: gives the scheduler ILP to
        # hide the tiny per-step matmul / EUP latency under adjacent steps.
        for j in range(_CHUNK):
            gxt = gx_blk[j:j + 1, :]                      # (1, 3H) static slice
            gh = jnp.dot(h, whh, preferred_element_type=jnp.float32)  # (1, 3H)
            s = jax.nn.sigmoid(gxt + gh)   # one EUP push covers r and z thirds
            r = s[:, 0:H]
            z = s[:, H:2 * H]
            n = jnp.tanh(gxt[:, 2 * H:] + r * (gh[:, 2 * H:] + bhn))
            h = n + z * (h - n)            # == (1 - z) * n + z * h
            hs_rows.append(h)

        hs_blk = jnp.concatenate(hs_rows, axis=0)         # (8, H)

        # Fused linear head + row softmax for the chunk (lane-dense store).
        logits = jnp.dot(hs_blk, wlin, preferred_element_type=jnp.float32) + blin
        m = jnp.max(logits, axis=1, keepdims=True)
        e = jnp.exp(logits - m)                           # padded lanes -> 0
        inv = pl.reciprocal(jnp.sum(e, axis=1, keepdims=True), approx=True)
        out_ref[pl.ds(base, _CHUNK), :] = e * inv
        return h

    h0 = jnp.zeros((1, H), jnp.float32)
    lax.fori_loop(0, n_chunks, chunk_body, h0)
    # TODO(synk): for very long sequences, add a seq-chunked grid axis so the
    #             gx scratch / output stay within the v7x 64 MiB VMEM budget,
    #             and consider batching independent sequences onto sublanes
    #             (B, H) to fill the MXU; on v5e, matmul_push_rhs could keep
    #             Whh resident in the MXU staging registers across steps.


def rds_policy_forward(x, w_ih, w_hh, b_ih, b_hh, w_lin, b_lin):
    """x: [seq, input_dim]; weights in PyTorch layout (w_ih:[3H,I], w_hh:[3H,H],
    w_lin:[O,H]).  Returns softmax probabilities [seq, output_dim]."""
    x = jnp.asarray(x, jnp.float32)
    seq, input_dim = x.shape
    three_h = w_ih.shape[0]
    H = three_h // 3
    O = w_lin.shape[0]
    OP = max(128, ((O + 127) // 128) * 128)          # lane-dense output width
    S_pad = ((seq + _CHUNK - 1) // _CHUNK) * _CHUNK  # full-sublane row count

    # Pre-transpose weights; fold the r/z thirds of b_hh into b_ih; keep b_hn.
    wih_t = jnp.asarray(w_ih, jnp.float32).T                         # [I, 3H]
    whh_t = jnp.asarray(w_hh, jnp.float32).T                         # [H, 3H]
    bih = jnp.asarray(b_ih, jnp.float32)
    bhh = jnp.asarray(b_hh, jnp.float32)
    bih_folded = bih.at[:2 * H].add(bhh[:2 * H]).reshape(1, three_h)
    bhn = bhh[2 * H:].reshape(1, H)

    # Lane-dense linear head: pad O up to OP lanes; padded lanes get a huge
    # negative bias so their softmax probability is exactly 0.
    wlin_t = jnp.asarray(w_lin, jnp.float32).T                       # [H, O]
    wlin_pad = jnp.zeros((H, OP), jnp.float32).at[:, :O].set(wlin_t)
    blin_pad = (jnp.full((1, OP), _NEG_BIG, jnp.float32)
                .at[0, :O].set(jnp.asarray(b_lin, jnp.float32)))

    # Pad the sequence to a multiple of 8 rows (causal recurrence: padded
    # trailing rows never affect the first `seq` hidden states).
    x_pad = jnp.zeros((S_pad, input_dim), jnp.float32).at[:seq].set(x)

    full = lambda shape: pl.BlockSpec(shape, lambda i: (0,) * len(shape))

    out_full = pl.pallas_call(
        _rds_policy_kernel,
        out_shape=jax.ShapeDtypeStruct((S_pad, OP), jnp.float32),
        grid=(1,),
        in_specs=[
            full((S_pad, input_dim)),
            full((input_dim, three_h)),
            full((H, three_h)),
            full((1, three_h)),
            full((1, H)),
            full((H, OP)),
            full((1, OP)),
        ],
        out_specs=full((S_pad, OP)),
        scratch_shapes=[
            pltpu.VMEM((S_pad, three_h), jnp.float32),   # gx: input gate preacts
        ],
        compiler_params=pltpu.CompilerParams(
            dimension_semantics=("arbitrary",)),
    )(x_pad, wih_t, whh_t, bih_folded, bhn, wlin_pad, blin_pad)

    return out_full[:seq, :O]


def _reference_forward(x, w_ih, w_hh, b_ih, b_hh, w_lin, b_lin):
    """Pure-JAX reference matching torch.nn.GRU + Linear + Softmax."""
    H = w_hh.shape[1]

    def step(h, x_t):
        gx = x_t @ w_ih.T + b_ih
        gh = h @ w_hh.T + b_hh
        r = jax.nn.sigmoid(gx[0:H] + gh[0:H])
        z = jax.nn.sigmoid(gx[H:2 * H] + gh[H:2 * H])
        n = jnp.tanh(gx[2 * H:3 * H] + r * gh[2 * H:3 * H])
        h_new = (1.0 - z) * n + z * h
        return h_new, h_new

    _, hs = lax.scan(step, jnp.zeros((H,), jnp.float32), x)
    logits = hs @ w_lin.T + b_lin
    return jax.nn.softmax(logits, axis=1)


if __name__ == "__main__":
    # Small shapes implied by the module: a single sequence of feature vectors.
    seq, input_dim, hidden_dim, output_dim = 8, 4, 32, 2

    key = jax.random.PRNGKey(0)
    ks = jax.random.split(key, 7)
    # Deterministic init, mimicking PyTorch's uniform(-1/sqrt(H), 1/sqrt(H)).
    s = 1.0 / np.sqrt(hidden_dim)
    w_ih = jax.random.uniform(ks[0], (3 * hidden_dim, input_dim), jnp.float32, -s, s)
    w_hh = jax.random.uniform(ks[1], (3 * hidden_dim, hidden_dim), jnp.float32, -s, s)
    b_ih = jax.random.uniform(ks[2], (3 * hidden_dim,), jnp.float32, -s, s)
    b_hh = jax.random.uniform(ks[3], (3 * hidden_dim,), jnp.float32, -s, s)
    w_lin = jax.random.uniform(ks[4], (output_dim, hidden_dim), jnp.float32, -s, s)
    b_lin = jax.random.uniform(ks[5], (output_dim,), jnp.float32, -s, s)

    x = jax.random.normal(ks[6], (seq, input_dim), jnp.float32)

    out = rds_policy_forward(x, w_ih, w_hh, b_ih, b_hh, w_lin, b_lin)
    out = jax.block_until_ready(out)

    ref = _reference_forward(x, w_ih, w_hh, b_ih, b_hh, w_lin, b_lin)
    ref = jax.block_until_ready(ref)

    assert out.shape == (seq, output_dim)
    # Tolerance relaxed slightly (vs f32 exact) for the approx EUP reciprocal
    # in the softmax denominator.
    np.testing.assert_allclose(np.asarray(out), np.asarray(ref),
                               rtol=2e-3, atol=2e-3)

    print("KERNEL_OK")
</pallas_src>

<mosaic_0001>
module attributes {stable_mosaic.version = 11 : i64} {
  func.func @_rds_policy_kernel(%arg0: i32, %arg1: memref<8x4xf32, #tpu.memory_space<vmem>>, %arg2: memref<4x96xf32, #tpu.memory_space<vmem>>, %arg3: memref<32x96xf32, #tpu.memory_space<vmem>>, %arg4: memref<1x96xf32, #tpu.memory_space<vmem>>, %arg5: memref<1x32xf32, #tpu.memory_space<vmem>>, %arg6: memref<32x128xf32, #tpu.memory_space<vmem>>, %arg7: memref<1x128xf32, #tpu.memory_space<vmem>>, %arg8: memref<8x128xf32, #tpu.memory_space<vmem>>, %arg9: memref<8x96xf32, #tpu.memory_space<vmem>>) attributes {dimension_semantics = [#tpu.dimension_semantics<arbitrary>], iteration_bounds = array<i64: 1>, scalar_prefetch = 0 : i64, scratch_operands = 1 : i64, tpu.core_type = #tpu.core_type<tc>, window_params = [{pipeline_mode = #tpu.pipeline_mode<synchronous>, transform_indices = @transform_0, window_bounds = array<i64: 8, 4>}, {pipeline_mode = #tpu.pipeline_mode<synchronous>, transform_indices = @transform_1, window_bounds = array<i64: 4, 96>}, {pipeline_mode = #tpu.pipeline_mode<synchronous>, transform_indices = @transform_2, window_bounds = array<i64: 32, 96>}, {pipeline_mode = #tpu.pipeline_mode<synchronous>, transform_indices = @transform_3, window_bounds = array<i64: 1, 96>}, {pipeline_mode = #tpu.pipeline_mode<synchronous>, transform_indices = @transform_4, window_bounds = array<i64: 1, 32>}, {pipeline_mode = #tpu.pipeline_mode<synchronous>, transform_indices = @transform_5, window_bounds = array<i64: 32, 128>}, {pipeline_mode = #tpu.pipeline_mode<synchronous>, transform_indices = @transform_6, window_bounds = array<i64: 1, 128>}, {pipeline_mode = #tpu.pipeline_mode<synchronous>, transform_indices = @transform_7, window_bounds = array<i64: 8, 128>}]} {
    %c0 = arith.constant 0 : index
    %c0_0 = arith.constant 0 : index
    %0 = vector.load %arg1[%c0, %c0_0] : memref<8x4xf32, #tpu.memory_space<vmem>>, vector<8x4xf32>
    %c0_1 = arith.constant 0 : index
    %c0_2 = arith.constant 0 : index
    %1 = vector.load %arg2[%c0_1, %c0_2] : memref<4x96xf32, #tpu.memory_space<vmem>>, vector<4x96xf32>
    %cst = arith.constant dense<0.000000e+00> : vector<8x96xf32>
    %2 = tpu.matmul %0, %1, %cst {dimension_numbers = #tpu.dot_dimension_numbers<[1], [0], [0], [1], [0, 0, 1, 1], [], []>} : vector<8x4xf32>, vector<4x96xf32>, vector<8x96xf32> -> vector<8x96xf32>
    %c0_3 = arith.constant 0 : index
    %c0_4 = arith.constant 0 : index
    %3 = vector.load %arg4[%c0_3, %c0_4] : memref<1x96xf32, #tpu.memory_space<vmem>>, vector<1x96xf32>
    %4 = vector.broadcast %3 : vector<1x96xf32> to vector<8x96xf32>
    %5 = arith.addf %2, %4 : vector<8x96xf32>
    %c0_5 = arith.constant 0 : index
    %c0_6 = arith.constant 0 : index
    %6 = vector.load %arg9[%c0_5, %c0_6] : memref<8x96xf32, #tpu.memory_space<vmem>>, vector<8x96xf32>
    tpu.vector_store %arg9[%c0_5, %c0_6], %5 {strides = array<i32>} : memref<8x96xf32, #tpu.memory_space<vmem>>, vector<8x96xf32>,
    %c0_7 = arith.constant 0 : index
    %c0_8 = arith.constant 0 : index
    %7 = vector.load %arg3[%c0_7, %c0_8] : memref<32x96xf32, #tpu.memory_space<vmem>>, vector<32x96xf32>
    %c0_9 = arith.constant 0 : index
    %c0_10 = arith.constant 0 : index
    %8 = vector.load %arg5[%c0_9, %c0_10] : memref<1x32xf32, #tpu.memory_space<vmem>>, vector<1x32xf32>
    %c0_11 = arith.constant 0 : index
    %c0_12 = arith.constant 0 : index
    %9 = vector.load %arg6[%c0_11, %c0_12] : memref<32x128xf32, #tpu.memory_space<vmem>>, vector<32x128xf32>
    %c0_13 = arith.constant 0 : index
    %c0_14 = arith.constant 0 : index
    %10 = vector.load %arg7[%c0_13, %c0_14] : memref<1x128xf32, #tpu.memory_space<vmem>>, vector<1x128xf32>
    %cst_15 = arith.constant 0.000000e+00 : f32
    %11 = vector.broadcast %cst_15 : f32 to vector<1x32xf32>
    %c0_i32 = arith.constant 0 : i32
    %c8_i32 = arith.constant 8 : i32
    %12 = arith.muli %c0_i32, %c8_i32 : i32
    %13 = tpu.assume_multiple %12, 8 : i32
    %14 = arith.index_cast %13 : i32 to index
    %c0_16 = arith.constant 0 : index
    %15 = vector.load %arg9[%14, %c0_16] : memref<8x96xf32, #tpu.memory_space<vmem>>, vector<8x96xf32>
    %16 = vector.extract_strided_slice %15 {offsets = [0, 0], sizes = [1, 96], strides = [1, 1]} : vector<8x96xf32> to vector<1x96xf32>
    %cst_17 = arith.constant dense<0.000000e+00> : vector<1x96xf32>
    %17 = tpu.matmul %11, %7, %cst_17 {dimension_numbers = #tpu.dot_dimension_numbers<[1], [0], [0], [1], [0, 0, 1, 1], [], []>} : vector<1x32xf32>, vector<32x96xf32>, vector<1x96xf32> -> vector<1x96xf32>
    %18 = arith.addf %16, %17 : vector<1x96xf32>
    %19 = arith.negf %18 : vector<1x96xf32>
    %20 = math.exp %19 : vector<1x96xf32>
    %cst_18 = arith.constant 1.000000e+00 : f32
    %21 = vector.broadcast %cst_18 : f32 to vector<1x96xf32>
    %22 = arith.addf %21, %20 : vector<1x96xf32>
    %23 = arith.divf %21, %22 : vector<1x96xf32>
    %24 = vector.extract_strided_slice %23 {offsets = [0, 0], sizes = [1, 32], strides = [1, 1]} : vector<1x96xf32> to vector<1x32xf32>
    %25 = vector.extract_strided_slice %23 {offsets = [0, 32], sizes = [1, 32], strides = [1, 1]} : vector<1x96xf32> to vector<1x32xf32>
    %26 = vector.extract_strided_slice %16 {offsets = [0, 64], sizes = [1, 32], strides = [1, 1]} : vector<1x96xf32> to vector<1x32xf32>
    %27 = vector.extract_strided_slice %17 {offsets = [0, 64], sizes = [1, 32], strides = [1, 1]} : vector<1x96xf32> to vector<1x32xf32>
    %28 = arith.addf %27, %8 : vector<1x32xf32>
    %29 = arith.mulf %24, %28 : vector<1x32xf32>
    %30 = arith.addf %26, %29 : vector<1x32xf32>
    %31 = math.tanh %30 : vector<1x32xf32>
    %32 = arith.subf %11, %31 : vector<1x32xf32>
    %33 = arith.mulf %25, %32 : vector<1x32xf32>
    %34 = arith.addf %31, %33 : vector<1x32xf32>
    %35 = vector.extract_strided_slice %15 {offsets = [1, 0], sizes = [1, 96], strides = [1, 1]} : vector<8x96xf32> to vector<1x96xf32>
    %cst_19 = arith.constant dense<0.000000e+00> : vector<1x96xf32>
    %36 = tpu.matmul %34, %7, %cst_19 {dimension_numbers = #tpu.dot_dimension_numbers<[1], [0], [0], [1], [0, 0, 1, 1], [], []>} : vector<1x32xf32>, vector<32x96xf32>, vector<1x96xf32> -> vector<1x96xf32>
    %37 = arith.addf %35, %36 : vector<1x96xf32>
    %38 = arith.negf %37 : vector<1x96xf32>
    %39 = math.exp %38 : vector<1x96xf32>
    %cst_20 = arith.constant 1.000000e+00 : f32
    %40 = vector.broadcast %cst_20 : f32 to vector<1x96xf32>
    %41 = arith.addf %40, %39 : vector<1x96xf32>
    %42 = arith.divf %40, %41 : vector<1x96xf32>
    %43 = vector.extract_strided_slice %42 {offsets = [0, 0], sizes = [1, 32], strides = [1, 1]} : vector<1x96xf32> to vector<1x32xf32>
    %44 = vector.extract_strided_slice %42 {offsets = [0, 32], sizes = [1, 32], strides = [1, 1]} : vector<1x96xf32> to vector<1x32xf32>
    %45 = vector.extract_strided_slice %35 {offsets = [0, 64], sizes = [1, 32], strides = [1, 1]} : vector<1x96xf32> to vector<1x32xf32>
    %46 = vector.extract_strided_slice %36 {offsets = [0, 64], sizes = [1, 32], strides = [1, 1]} : vector<1x96xf32> to vector<1x32xf32>
    %47 = arith.addf %46, %8 : vector<1x32xf32>
    %48 = arith.mulf %43, %47 : vector<1x32xf32>
    %49 = arith.addf %45, %48 : vector<1x32xf32>
    %50 = math.tanh %49 : vector<1x32xf32>
    %51 = arith.subf %34, %50 : vector<1x32xf32>
    %52 = arith.mulf %44, %51 : vector<1x32xf32>
    %53 = arith.addf %50, %52 : vector<1x32xf32>
    %54 = vector.extract_strided_slice %15 {offsets = [2, 0], sizes = [1, 96], strides = [1, 1]} : vector<8x96xf32> to vector<1x96xf32>
    %cst_21 = arith.constant dense<0.000000e+00> : vector<1x96xf32>
    %55 = tpu.matmul %53, %7, %cst_21 {dimension_numbers = #tpu.dot_dimension_numbers<[1], [0], [0], [1], [0, 0, 1, 1], [], []>} : vector<1x32xf32>, vector<32x96xf32>, vector<1x96xf32> -> vector<1x96xf32>
    %56 = arith.addf %54, %55 : vector<1x96xf32>
    %57 = arith.negf %56 : vector<1x96xf32>
    %58 = math.exp %57 : vector<1x96xf32>
    %cst_22 = arith.constant 1.000000e+00 : f32
    %59 = vector.broadcast %cst_22 : f32 to vector<1x96xf32>
    %60 = arith.addf %59, %58 : vector<1x96xf32>
    %61 = arith.divf %59, %60 : vector<1x96xf32>
    %62 = vector.extract_strided_slice %61 {offsets = [0, 0], sizes = [1, 32], strides = [1, 1]} : vector<1x96xf32> to vector<1x32xf32>
    %63 = vector.extract_strided_slice %61 {offsets = [0, 32], sizes = [1, 32], strides = [1, 1]} : vector<1x96xf32> to vector<1x32xf32>
    %64 = vector.extract_strided_slice %54 {offsets = [0, 64], sizes = [1, 32], strides = [1, 1]} : vector<1x96xf32> to vector<1x32xf32>
    %65 = vector.extract_strided_slice %55 {offsets = [0, 64], sizes = [1, 32], strides = [1, 1]} : vector<1x96xf32> to vector<1x32xf32>
    %66 = arith.addf %65, %8 : vector<1x32xf32>
    %67 = arith.mulf %62, %66 : vector<1x32xf32>
    %68 = arith.addf %64, %67 : vector<1x32xf32>
    %69 = math.tanh %68 : vector<1x32xf32>
    %70 = arith.subf %53, %69 : vector<1x32xf32>
    %71 = arith.mulf %63, %70 : vector<1x32xf32>
    %72 = arith.addf %69, %71 : vector<1x32xf32>
    %73 = vector.extract_strided_slice %15 {offsets = [3, 0], sizes = [1, 96], strides = [1, 1]} : vector<8x96xf32> to vector<1x96xf32>
    %cst_23 = arith.constant dense<0.000000e+00> : vector<1x96xf32>
    %74 = tpu.matmul %72, %7, %cst_23 {dimension_numbers = #tpu.dot_dimension_numbers<[1], [0], [0], [1], [0, 0, 1, 1], [], []>} : vector<1x32xf32>, vector<32x96xf32>, vector<1x96xf32> -> vector<1x96xf32>
    %75 = arith.addf %73, %74 : vector<1x96xf32>
    %76 = arith.negf %75 : vector<1x96xf32>
    %77 = math.exp %76 : vector<1x96xf32>
    %cst_24 = arith.constant 1.000000e+00 : f32
    %78 = vector.broadcast %cst_24 : f32 to vector<1x96xf32>
    %79 = arith.addf %78, %77 : vector<1x96xf32>
    %80 = arith.divf %78, %79 : vector<1x96xf32>
    %81 = vector.extract_strided_slice %80 {offsets = [0, 0], sizes = [1, 32], strides = [1, 1]} : vector<1x96xf32> to vector<1x32xf32>
    %82 = vector.extract_strided_slice %80 {offsets = [0, 32], sizes = [1, 32], strides = [1, 1]} : vector<1x96xf32> to vector<1x32xf32>
    %83 = vector.extract_strided_slice %73 {offsets = [0, 64], sizes = [1, 32], strides = [1, 1]} : vector<1x96xf32> to vector<1x32xf32>
    %84 = vector.extract_strided_slice %74 {offsets = [0, 64], sizes = [1, 32], strides = [1, 1]} : vector<1x96xf32> to vector<1x32xf32>
    %85 = arith.addf %84, %8 : vector<1x32xf32>
    %86 = arith.mulf %81, %85 : vector<1x32xf32>
    %87 = arith.addf %83, %86 : vector<1x32xf32>
    %88 = math.tanh %87 : vector<1x32xf32>
    %89 = arith.subf %72, %88 : vector<1x32xf32>
    %90 = arith.mulf %82, %89 : vector<1x32xf32>
    %91 = arith.addf %88, %90 : vector<1x32xf32>
    %92 = vector.extract_strided_slice %15 {offsets = [4, 0], sizes = [1, 96], strides = [1, 1]} : vector<8x96xf32> to vector<1x96xf32>
    %cst_25 = arith.constant dense<0.000000e+00> : vector<1x96xf32>
    %93 = tpu.matmul %91, %7, %cst_25 {dimension_numbers = #tpu.dot_dimension_numbers<[1], [0], [0], [1], [0, 0, 1, 1], [], []>} : vector<1x32xf32>, vector<32x96xf32>, vector<1x96xf32> -> vector<1x96xf32>
    %94 = arith.addf %92, %93 : vector<1x96xf32>
    %95 = arith.negf %94 : vector<1x96xf32>
    %96 = math.exp %95 : vector<1x96xf32>
    %cst_26 = arith.constant 1.000000e+00 : f32
    %97 = vector.broadcast %cst_26 : f32 to vector<1x96xf32>
    %98 = arith.addf %97, %96 : vector<1x96xf32>
    %99 = arith.divf %97, %98 : vector<1x96xf32>
    %100 = vector.extract_strided_slice %99 {offsets = [0, 0], sizes = [1, 32], strides = [1, 1]} : vector<1x96xf32> to vector<1x32xf32>
    %101 = vector.extract_strided_slice %99 {offsets = [0, 32], sizes = [1, 32], strides = [1, 1]} : vector<1x96xf32> to vector<1x32xf32>
    %102 = vector.extract_strided_slice %92 {offsets = [0, 64], sizes = [1, 32], strides = [1, 1]} : vector<1x96xf32> to vector<1x32xf32>
    %103 = vector.extract_strided_slice %93 {offsets = [0, 64], sizes = [1, 32], strides = [1, 1]} : vector<1x96xf32> to vector<1x32xf32>
    %104 = arith.addf %103, %8 : vector<1x32xf32>
    %105 = arith.mulf %100, %104 : vector<1x32xf32>
    %106 = arith.addf %102, %105 : vector<1x32xf32>
    %107 = math.tanh %106 : vector<1x32xf32>
    %108 = arith.subf %91, %107 : vector<1x32xf32>
    %109 = arith.mulf %101, %108 : vector<1x32xf32>
    %110 = arith.addf %107, %109 : vector<1x32xf32>
    %111 = vector.extract_strided_slice %15 {offsets = [5, 0], sizes = [1, 96], strides = [1, 1]} : vector<8x96xf32> to vector<1x96xf32>
    %cst_27 = arith.constant dense<0.000000e+00> : vector<1x96xf32>
    %112 = tpu.matmul %110, %7, %cst_27 {dimension_numbers = #tpu.dot_dimension_numbers<[1], [0], [0], [1], [0, 0, 1, 1], [], []>} : vector<1x32xf32>, vector<32x96xf32>, vector<1x96xf32> -> vector<1x96xf32>
    %113 = arith.addf %111, %112 : vector<1x96xf32>
    %114 = arith.negf %113 : vector<1x96xf32>
    %115 = math.exp %114 : vector<1x96xf32>
    %cst_28 = arith.constant 1.000000e+00 : f32
    %116 = vector.broadcast %cst_28 : f32 to vector<1x96xf32>
    %117 = arith.addf %116, %115 : vector<1x96xf32>
    %118 = arith.divf %116, %117 : vector<1x96xf32>
    %119 = vector.extract_strided_slice %118 {offsets = [0, 0], sizes = [1, 32], strides = [1, 1]} : vector<1x96xf32> to vector<1x32xf32>
    %120 = vector.extract_strided_slice %118 {offsets = [0, 32], sizes = [1, 32], strides = [1, 1]} : vector<1x96xf32> to vector<1x32xf32>
    %121 = vector.extract_strided_slice %111 {offsets = [0, 64], sizes = [1, 32], strides = [1, 1]} : vector<1x96xf32> to vector<1x32xf32>
    %122 = vector.extract_strided_slice %112 {offsets = [0, 64], sizes = [1, 32], strides = [1, 1]} : vector<1x96xf32> to vector<1x32xf32>
    %123 = arith.addf %122, %8 : vector<1x32xf32>
    %124 = arith.mulf %119, %123 : vector<1x32xf32>
    %125 = arith.addf %121, %124 : vector<1x32xf32>
    %126 = math.tanh %125 : vector<1x32xf32>
    %127 = arith.subf %110, %126 : vector<1x32xf32>
    %128 = arith.mulf %120, %127 : vector<1x32xf32>
    %129 = arith.addf %126, %128 : vector<1x32xf32>
    %130 = vector.extract_strided_slice %15 {offsets = [6, 0], sizes = [1, 96], strides = [1, 1]} : vector<8x96xf32> to vector<1x96xf32>
    %cst_29 = arith.constant dense<0.000000e+00> : vector<1x96xf32>
    %131 = tpu.matmul %129, %7, %cst_29 {dimension_numbers = #tpu.dot_dimension_numbers<[1], [0], [0], [1], [0, 0, 1, 1], [], []>} : vector<1x32xf32>, vector<32x96xf32>, vector<1x96xf32> -> vector<1x96xf32>
    %132 = arith.addf %130, %131 : vector<1x96xf32>
    %133 = arith.negf %132 : vector<1x96xf32>
    %134 = math.exp %133 : vector<1x96xf32>
    %cst_30 = arith.constant 1.000000e+00 : f32
    %135 = vector.broadcast %cst_30 : f32 to vector<1x96xf32>
    %136 = arith.addf %135, %134 : vector<1x96xf32>
    %137 = arith.divf %135, %136 : vector<1x96xf32>
    %138 = vector.extract_strided_slice %137 {offsets = [0, 0], sizes = [1, 32], strides = [1, 1]} : vector<1x96xf32> to vector<1x32xf32>
    %139 = vector.extract_strided_slice %137 {offsets = [0, 32], sizes = [1, 32], strides = [1, 1]} : vector<1x96xf32> to vector<1x32xf32>
    %140 = vector.extract_strided_slice %130 {offsets = [0, 64], sizes = [1, 32], strides = [1, 1]} : vector<1x96xf32> to vector<1x32xf32>
    %141 = vector.extract_strided_slice %131 {offsets = [0, 64], sizes = [1, 32], strides = [1, 1]} : vector<1x96xf32> to vector<1x32xf32>
    %142 = arith.addf %141, %8 : vector<1x32xf32>
    %143 = arith.mulf %138, %142 : vector<1x32xf32>
    %144 = arith.addf %140, %143 : vector<1x32xf32>
    %145 = math.tanh %144 : vector<1x32xf32>
    %146 = arith.subf %129, %145 : vector<1x32xf32>
    %147 = arith.mulf %139, %146 : vector<1x32xf32>
    %148 = arith.addf %145, %147 : vector<1x32xf32>
    %149 = vector.extract_strided_slice %15 {offsets = [7, 0], sizes = [1, 96], strides = [1, 1]} : vector<8x96xf32> to vector<1x96xf32>
    %cst_31 = arith.constant dense<0.000000e+00> : vector<1x96xf32>
    %150 = tpu.matmul %148, %7, %cst_31 {dimension_numbers = #tpu.dot_dimension_numbers<[1], [0], [0], [1], [0, 0, 1, 1], [], []>} : vector<1x32xf32>, vector<32x96xf32>, vector<1x96xf32> -> vector<1x96xf32>
    %151 = arith.addf %149, %150 : vector<1x96xf32>
    %152 = arith.negf %151 : vector<1x96xf32>
    %153 = math.exp %152 : vector<1x96xf32>
    %cst_32 = arith.constant 1.000000e+00 : f32
    %154 = vector.broadcast %cst_32 : f32 to vector<1x96xf32>
    %155 = arith.addf %154, %153 : vector<1x96xf32>
    %156 = arith.divf %154, %155 : vector<1x96xf32>
    %157 = vector.extract_strided_slice %156 {offsets = [0, 0], sizes = [1, 32], strides = [1, 1]} : vector<1x96xf32> to vector<1x32xf32>
    %158 = vector.extract_strided_slice %156 {offsets = [0, 32], sizes = [1, 32], strides = [1, 1]} : vector<1x96xf32> to vector<1x32xf32>
    %159 = vector.extract_strided_slice %149 {offsets = [0, 64], sizes = [1, 32], strides = [1, 1]} : vector<1x96xf32> to vector<1x32xf32>
    %160 = vector.extract_strided_slice %150 {offsets = [0, 64], sizes = [1, 32], strides = [1, 1]} : vector<1x96xf32> to vector<1x32xf32>
    %161 = arith.addf %160, %8 : vector<1x32xf32>
    %162 = arith.mulf %157, %161 : vector<1x32xf32>
    %163 = arith.addf %159, %162 : vector<1x32xf32>
    %164 = math.tanh %163 : vector<1x32xf32>
    %165 = arith.subf %148, %164 : vector<1x32xf32>
    %166 = arith.mulf %158, %165 : vector<1x32xf32>
    %167 = arith.addf %164, %166 : vector<1x32xf32>
    %168 = tpu.concatenate %34, %53, %72, %91, %110, %129, %148, %167 in 0 : vector<1x32xf32>, vector<1x32xf32>, vector<1x32xf32>, vector<1x32xf32>, vector<1x32xf32>, vector<1x32xf32>, vector<1x32xf32>, vector<1x32xf32> -> vector<8x32xf32>
    %cst_33 = arith.constant dense<0.000000e+00> : vector<8x128xf32>
    %169 = tpu.matmul %168, %9, %cst_33 {dimension_numbers = #tpu.dot_dimension_numbers<[1], [0], [0], [1], [0, 0, 1, 1], [], []>} : vector<8x32xf32>, vector<32x128xf32>, vector<8x128xf32> -> vector<8x128xf32>
    %170 = vector.broadcast %10 : vector<1x128xf32> to vector<8x128xf32>
    %171 = arith.addf %169, %170 : vector<8x128xf32>
    %cst_34 = arith.constant dense<0xFF800000> : vector<8xf32>
    %172 = vector.multi_reduction <maximumf>, %171, %cst_34 [1] : vector<8x128xf32> to vector<8xf32>
    %173 = vector.shape_cast %172 : vector<8xf32> to vector<8x1xf32>
    %174 = vector.broadcast %173 : vector<8x1xf32> to vector<8x128xf32>
    %175 = arith.subf %171, %174 : vector<8x128xf32>
    %176 = math.exp %175 : vector<8x128xf32>
    %cst_35 = arith.constant dense<0.000000e+00> : vector<8xf32>
    %177 = vector.multi_reduction <add>, %176, %cst_35 [1] : vector<8x128xf32> to vector<8xf32>
    %178 = vector.shape_cast %177 : vector<8xf32> to vector<8x1xf32>
    %179 = tpu.reciprocal %178 {approx = true} : vector<8x1xf32> -> vector<8x1xf32>
    %180 = vector.broadcast %179 : vector<8x1xf32> to vector<8x128xf32>
    %181 = arith.mulf %176, %180 : vector<8x128xf32>
    %182 = arith.index_cast %13 : i32 to index
    %c0_36 = arith.constant 0 : index
    %183 = vector.load %arg8[%182, %c0_36] : memref<8x128xf32, #tpu.memory_space<vmem>>, vector<8x128xf32>
    tpu.vector_store %arg8[%182, %c0_36], %181 {strides = array<i32>} : memref<8x128xf32, #tpu.memory_space<vmem>>, vector<8x128xf32>,
    %c1_i32 = arith.constant 1 : i32
    return
  }
  func.func @transform_0(%arg0: i32) -> (i32, i32) {
    %c0_i32 = arith.constant 0 : i32
    %c0_i32_0 = arith.constant 0 : i32
    %c0_i32_1 = arith.constant 0 : i32
    return %c0_i32, %c0_i32_0 : i32, i32
  }
  func.func @transform_1(%arg0: i32) -> (i32, i32) {
    %c0_i32 = arith.constant 0 : i32
    %c0_i32_0 = arith.constant 0 : i32
    %c0_i32_1 = arith.constant 0 : i32
    return %c0_i32, %c0_i32_0 : i32, i32
  }
  func.func @transform_2(%arg0: i32) -> (i32, i32) {
    %c0_i32 = arith.constant 0 : i32
    %c0_i32_0 = arith.constant 0 : i32
    %c0_i32_1 = arith.constant 0 : i32
    return %c0_i32, %c0_i32_0 : i32, i32
  }
  func.func @transform_3(%arg0: i32) -> (i32, i32) {
    %c0_i32 = arith.constant 0 : i32
    %c0_i32_0 = arith.constant 0 : i32
    %c0_i32_1 = arith.constant 0 : i32
    return %c0_i32, %c0_i32_0 : i32, i32
  }
  func.func @transform_4(%arg0: i32) -> (i32, i32) {
    %c0_i32 = arith.constant 0 : i32
    %c0_i32_0 = arith.constant 0 : i32
    %c0_i32_1 = arith.constant 0 : i32
    return %c0_i32, %c0_i32_0 : i32, i32
  }
  func.func @transform_5(%arg0: i32) -> (i32, i32) {
    %c0_i32 = arith.constant 0 : i32
    %c0_i32_0 = arith.constant 0 : i32
    %c0_i32_1 = arith.constant 0 : i32
    return %c0_i32, %c0_i32_0 : i32, i32
  }
  func.func @transform_6(%arg0: i32) -> (i32, i32) {
    %c0_i32 = arith.constant 0 : i32
    %c0_i32_0 = arith.constant 0 : i32
    %c0_i32_1 = arith.constant 0 : i32
    return %c0_i32, %c0_i32_0 : i32, i32
  }
  func.func @transform_7(%arg0: i32) -> (i32, i32) {
    %c0_i32 = arith.constant 0 : i32
    %c0_i32_0 = arith.constant 0 : i32
    %c0_i32_1 = arith.constant 0 : i32
    return %c0_i32, %c0_i32_0 : i32, i32
  }
}

</mosaic_0001>

<llo_original>
// kernel: tpu_custom_call.1
$region0: #{tpu_custom_call.1}
  #allocation0 [shape = 'u32[]', space=smem, size = 0x4, offset = 0x4, fixed_abs, tag = 'smem constant byte address 0x4 - core index']
  #allocation1 [shape = 'u32[144,128]{1,0:T(1,128)}', space=vmem, size = 0x12000, scoped, tag = 'internal scratch']
  #allocation2 [shape = 'f32[8,96]{1,0:T(8,128)}', space=vmem, size = 0x1000, scoped, tag = 'scratch operand']
  %s0 = inlined_call_operand.vmem [shape: f32[8,4], index: 0, kind: input, shape index: {}]
  %s1 = inlined_call_operand.vmem [shape: f32[4,96], index: 1, kind: input, shape index: {}]
  %s2 = inlined_call_operand.hbm [shape: f32[32,96], index: 2, kind: input, shape index: {}]
  %s3 = inlined_call_operand.vmem [shape: f32[1,96], index: 3, kind: input, shape index: {}]
  %s4 = inlined_call_operand.vmem [shape: f32[1,32], index: 4, kind: input, shape index: {}]
  %s5 = inlined_call_operand.hbm [shape: f32[32,128], index: 5, kind: input, shape index: {}]
  %s6 = inlined_call_operand.vmem [shape: f32[1,128], index: 6, kind: input, shape index: {}]
  %s7 = inlined_call_operand.hbm [shape: f32[8,128], index: 7, kind: output, shape index: {}]
  %s8 = sld [smem:[#allocation0]]
  $region46: #{tpu_custom_call.1} parent=0
    _
  %s10 = ssub.s32 1, %s8
  %s11 = scalar_select 0, %s10, %s8
  $region1: #{tpu_custom_call.1} parent=0
    #allocation3 [shape = 'u8[16384]{0}', space=vmem, size = 0x4000, scoped, tag = 'input window, operand 2, single buffered']
    #allocation4 [shape = 's32[1]{0}', space=sflag, size = 0x4, scoped, tag = 'scoped memory for tpu_custom_call.1']
    #allocation5 [shape = 's32[1]{0}', space=sflag, size = 0x4, scoped, tag = 'scoped memory for tpu_custom_call.1']
    #allocation6 [shape = 'u8[16384]{0}', space=vmem, size = 0x4000, scoped, tag = 'input window, operand 5, single buffered']
    #allocation7 [shape = 's32[1]{0}', space=sflag, size = 0x4, scoped, tag = 'scoped memory for tpu_custom_call.1']
    #allocation8 [shape = 'u8[4096]{0}', space=vmem, size = 0x1000, scoped, tag = 'output window, operand 0, single buffered']
    %12 = vsyncpa [#allocation4], 0
    %13 = vsyncpa [#allocation7], 0
    %14 = vsyncpa [#allocation5], 0
    // Predicated region
    $region2: #{tpu_custom_call.1} parent=1 // pred_check
      _
    $region3: #{tpu_custom_call.1} parent=1 // pred_check_branch
      %16 = sbr.rel (0) target = $region5
    $region4: #{tpu_custom_call.1} parent=1 // pred_region
      _
    $region5: #{tpu_custom_call.1} parent=1 // pred_fallthru
      _
    // Predicated region
    $region6: #{tpu_custom_call.1} parent=1 // pred_check
      _
    $region7: #{tpu_custom_call.1} parent=1 // pred_check_branch
      %18 = sbr.rel (0) target = $region9
    $region8: #{tpu_custom_call.1} parent=1 // pred_region
      _
    $region9: #{tpu_custom_call.1} parent=1 // pred_fallthru
      _
    // Predicated region
    $region10: #{tpu_custom_call.1} parent=1 // pred_check
      _
    $region11: #{tpu_custom_call.1} parent=1 // pred_check_branch
      %20 = sbr.rel (0) target = $region13
    $region12: #{tpu_custom_call.1} parent=1 // pred_region
      %s22 = ssub.s32 512, 512
      %23 = vsyncadd [#allocation4], %s22
      %s24 = sshll.u32 [#allocation3], 4
      %s25 = int_to_ptr.vmem [resolvable:$true] %s24
      %30 = dma.hbm_to_vmem [thread:$0]  %s2, 512, %s25, [#allocation4], 128, 128, 8
    $region13: #{tpu_custom_call.1} parent=1 // pred_fallthru
      _
    // Predicated region
    $region14: #{tpu_custom_call.1} parent=1 // pred_check
      _
    $region15: #{tpu_custom_call.1} parent=1 // pred_check_branch
      %32 = sbr.rel (0) target = $region17
    $region16: #{tpu_custom_call.1} parent=1 // pred_region
      _
    $region17: #{tpu_custom_call.1} parent=1 // pred_fallthru
      _
    // Predicated region
    $region18: #{tpu_custom_call.1} parent=1 // pred_check
      _
    $region19: #{tpu_custom_call.1} parent=1 // pred_check_branch
      %34 = sbr.rel (0) target = $region21
    $region20: #{tpu_custom_call.1} parent=1 // pred_region
      _
    $region21: #{tpu_custom_call.1} parent=1 // pred_fallthru
      _
    // Predicated region
    $region22: #{tpu_custom_call.1} parent=1 // pred_check
      _
    $region23: #{tpu_custom_call.1} parent=1 // pred_check_branch
      %36 = sbr.rel (0) target = $region25
    $region24: #{tpu_custom_call.1} parent=1 // pred_region
      %s38 = ssub.s32 512, 512
      %39 = vsyncadd [#allocation7], %s38
      %s40 = sshll.u32 [#allocation6], 4
      %s41 = int_to_ptr.vmem [resolvable:$true] %s40
      %46 = dma.hbm_to_vmem [thread:$0]  %s5, 512, %s41, [#allocation7], 128, 128, 8
    $region25: #{tpu_custom_call.1} parent=1 // pred_fallthru
      _
    // Predicated region
    $region26: #{tpu_custom_call.1} parent=1 // pred_check
      _
    $region27: #{tpu_custom_call.1} parent=1 // pred_check_branch
      %48 = sbr.rel (0) target = $region29
    $region28: #{tpu_custom_call.1} parent=1 // pred_region
      _
    $region29: #{tpu_custom_call.1} parent=1 // pred_fallthru
      _
    // Predicated region
    $region30: #{tpu_custom_call.1} parent=1 // pred_check
      _
    $region31: #{tpu_custom_call.1} parent=1 // pred_check_branch
      %50 = sbr.rel (0) target = $region33
    $region32: #{tpu_custom_call.1} parent=1 // pred_region
      %51 = dma.done [#allocation4], 512
    $region33: #{tpu_custom_call.1} parent=1 // pred_fallthru
      _
    // Predicated region
    $region34: #{tpu_custom_call.1} parent=1 // pred_check
      _
    $region35: #{tpu_custom_call.1} parent=1 // pred_check_branch
      %53 = sbr.rel (0) target = $region37
    $region36: #{tpu_custom_call.1} parent=1 // pred_region
      %54 = dma.done [#allocation7], 512
    $region37: #{tpu_custom_call.1} parent=1 // pred_fallthru
      _
    %v55 = vld [vmem:[%s0] sm:$0xff]
    %v56 = vld [vmem:[%s1] sm:$0xf]
    %v57 = vld [vmem:[%s3] sm:$0x1]
    %v59 = vlaneseq
    %v60 = vshrl.u32 %v59, 7
    %v61 = vsub.s32 0, %v60
    %v62 = vrot.slane %v57, %v61
    %vm64 = vcmask 31744
    %v66 = vsel %vm64, %v55, 0
    %vm68 = vcmask 1043456
    %v70 = vsel %vm68, %v56, 0
    %72 = vmatprep.subr.mxu0 0.0
    %73 = vmatpush1.msra.mxu0 %v70
    %74 = vmatprep.subr.mxu0 0.0
    %75 = vmatpush1.msra.mxu0 0.0
    %76 = vmatprep.subr.mxu0 0.0
    %77 = vmatpush1.msra.mxu0 0.0
    %78 = vmatprep.subr.mxu0 0.0
    %79 = vmatpush1.msra.mxu0 0.0
    %80 = vmatprep.subr.mxu0 0.0
    %81 = vmatpush1.msra.mxu0 0.0
    %82 = vmatprep.subr.mxu0 0.0
    %83 = vmatpush1.msra.mxu0 0.0
    %84 = vmatprep.subr.mxu0 0.0
    %85 = vmatpush1.msra.mxu0 0.0
    %86 = vmatprep.subr.mxu0 0.0
    %87 = vmatpush1.msra.mxu0 0.0
    %88 = vmatprep.subr.mxu0 0.0
    %89 = vmatpush1.msra.mxu0 0.0
    %90 = vmatprep.subr.mxu0 0.0
    %91 = vmatpush1.msra.mxu0 0.0
    %92 = vmatprep.subr.mxu0 0.0
    %93 = vmatpush1.msra.mxu0 0.0
    %94 = vmatprep.subr.mxu0 0.0
    %95 = vmatpush1.msra.mxu0 0.0
    %96 = vmatprep.subr.mxu0 0.0
    %97 = vmatpush1.msra.mxu0 0.0
    %98 = vmatprep.subr.mxu0 0.0
    %99 = vmatpush1.msra.mxu0 0.0
    %100 = vmatprep.subr.mxu0 0.0
    %101 = vmatpush1.msra.mxu0 0.0
    %102 = vmatprep.subr.mxu0 0.0
    %103 = vmatpush1.msra.mxu0 0.0
    %104 = vmatprep.subr.mxu0 0.0
    %105 = vmatpush1.msra.mxu0 0.0
    %106 = vmatprep.subr.mxu0 0.0
    %107 = vmatpush1.msra.mxu0 0.0
    %108 = vmatprep.subr.mxu0 0.0
    %109 = vmatpush1.msra.mxu0 0.0
    %110 = vmatprep.subr.mxu0 0.0
    %111 = vmatpush1.msra.mxu0 0.0
    %112 = vmatprep.subr.mxu0 0.0
    %113 = vmatpush1.msra.mxu0 0.0
    %114 = vmatprep.subr.mxu0 0.0
    %115 = vmatpush1.msra.mxu0 0.0
    %116 = vmatprep.subr.mxu0 0.0
    %117 = vmatpush1.msra.mxu0 0.0
    %118 = vmatprep.subr.mxu0 0.0
    %119 = vmatpush1.msra.mxu0 0.0
    %120 = vmatprep.subr.mxu0 0.0
    %121 = vmatpush1.msra.mxu0 0.0
    %122 = vmatprep.subr.mxu0 0.0
    %123 = vmatpush1.msra.mxu0 0.0
    %124 = vmatprep.subr.mxu0 0.0
    %125 = vmatpush1.msra.mxu0 0.0
    %126 = vmatprep.subr.mxu0 0.0
    %127 = vmatpush1.msra.mxu0 0.0
    %128 = vmatprep.subr.mxu0 0.0
    %129 = vmatpush1.msra.mxu0 0.0
    %130 = vmatprep.subr.mxu0 0.0
    %131 = vmatpush1.msra.mxu0 0.0
    %132 = vmatprep.subr.mxu0 0.0
    %133 = vmatpush1.msra.mxu0 0.0
    %134 = vmatprep.subr.mxu0 0.0
    %135 = vmatpush1.msra.mxu0 0.0
    %136 = vmatprep.mubr.f32.mxu0 0.0
    %137 = vmatmul.mubr.f32.gmra.mrb[0].mxu0 %v66
    %v138 = vpop.f32.mrb[0].mxu0
    %v139 = vadd.f32 %v62, %v138
    %v140 = vpop.f32.mrb[0].mxu0
    %141 = vdwg.mxu0
    %vm142 = vcmask 785408
    %143 = vst.msk [vmem:[#allocation2] sm:$0xff] %vm142, %v139
    %v144 = vld [vmem:[#allocation3] sm:$0xff]
    %v145 = vld [vmem:[#allocation3 + $0x8] sm:$0xff]
    %v146 = vld [vmem:[#allocation3 + $0x10] sm:$0xff]
    %v147 = vld [vmem:[#allocation3 + $0x18] sm:$0xff]
    %v148 = vld [vmem:[%s4] sm:$0x1]
    %v149 = vld [vmem:[#allocation6] sm:$0xff]
    %v150 = vld [vmem:[#allocation6 + $0x8] sm:$0xff]
    %v151 = vld [vmem:[#allocation6 + $0x10] sm:$0xff]
    %v152 = vld [vmem:[#allocation6 + $0x18] sm:$0xff]
    %v153 = vld [vmem:[%s6] sm:$0x1]
    %v154 = vld [vmem:[#allocation2] sm:$0xff]
    %vm155 = vcmask 261120
    %v157 = vsel %vm155, 0.0, 0
    %159 = vmatprep.subr.mxu0 0.0
    %160 = vmatpush1.msra.mxu0 %v144
    %161 = vmatprep.subr.mxu0 0.0
    %162 = vmatpush1.msra.mxu0 %v145
    %163 = vmatprep.subr.mxu0 0.0
    %164 = vmatpush1.msra.mxu0 %v146
    %165 = vmatprep.subr.mxu0 0.0
    %166 = vmatpush1.msra.mxu0 %v147
    %167 = vmatprep.subr.mxu0 0.0
    %168 = vmatpush1.msra.mxu0 0.0
    %169 = vmatprep.subr.mxu0 0.0
    %170 = vmatpush1.msra.mxu0 0.0
    %171 = vmatprep.subr.mxu0 0.0
    %172 = vmatpush1.msra.mxu0 0.0
    %173 = vmatprep.subr.mxu0 0.0
    %174 = vmatpush1.msra.mxu0 0.0
    %175 = vmatprep.subr.mxu0 0.0
    %176 = vmatpush1.msra.mxu0 0.0
    %177 = vmatprep.subr.mxu0 0.0
    %178 = vmatpush1.msra.mxu0 0.0
    %179 = vmatprep.subr.mxu0 0.0
    %180 = vmatpush1.msra.mxu0 0.0
    %181 = vmatprep.subr.mxu0 0.0
    %182 = vmatpush1.msra.mxu0 0.0
    %183 = vmatprep.subr.mxu0 0.0
    %184 = vmatpush1.msra.mxu0 0.0
    %185 = vmatprep.subr.mxu0 0.0
    %186 = vmatpush1.msra.mxu0 0.0
    %187 = vmatprep.subr.mxu0 0.0
    %188 = vmatpush1.msra.mxu0 0.0
    %189 = vmatprep.subr.mxu0 0.0
    %190 = vmatpush1.msra.mxu0 0.0
    %191 = vmatprep.subr.mxu0 0.0
    %192 = vmatpush1.msra.mxu0 0.0
    %193 = vmatprep.subr.mxu0 0.0
    %194 = vmatpush1.msra.mxu0 0.0
    %195 = vmatprep.subr.mxu0 0.0
    %196 = vmatpush1.msra.mxu0 0.0
    %197 = vmatprep.subr.mxu0 0.0
    %198 = vmatpush1.msra.mxu0 0.0
    %199 = vmatprep.subr.mxu0 0.0
    %200 = vmatpush1.msra.mxu0 0.0
    %201 = vmatprep.subr.mxu0 0.0
    %202 = vmatpush1.msra.mxu0 0.0
    %203 = vmatprep.subr.mxu0 0.0
    %204 = vmatpush1.msra.mxu0 0.0
    %205 = vmatprep.subr.mxu0 0.0
    %206 = vmatpush1.msra.mxu0 0.0
    %207 = vmatprep.subr.mxu0 0.0
    %208 = vmatpush1.msra.mxu0 0.0
    %209 = vmatprep.subr.mxu0 0.0
    %210 = vmatpush1.msra.mxu0 0.0
    %211 = vmatprep.subr.mxu0 0.0
    %212 = vmatpush1.msra.mxu0 0.0
    %213 = vmatprep.subr.mxu0 0.0
    %214 = vmatpush1.msra.mxu0 0.0
    %215 = vmatprep.subr.mxu0 0.0
    %216 = vmatpush1.msra.mxu0 0.0
    %217 = vmatprep.subr.mxu0 0.0
    %218 = vmatpush1.msra.mxu0 0.0
    %219 = vmatprep.subr.mxu0 0.0
    %220 = vmatpush1.msra.mxu0 0.0
    %221 = vmatprep.subr.mxu0 0.0
    %222 = vmatpush1.msra.mxu0 0.0
    %223 = vmatprep.mubr.f32.mxu0 0.0
    %224 = vmatmul.mubr.f32.gmra.mrb[0].mxu0 %v157
    %v225 = vpop.f32.mrb[0].mxu0
    %v226 = vadd.f32 0.0, %v225
    %v227 = vpop.f32.mrb[0].mxu0
    %228 = vdwg.mxu0
    %v229 = vadd.f32 %v154, %v226
    %v230 = vxor.u32 %v229, 2147483648
    %v231 = vmul.f32 %v230, 1.442695
    %v232 = vpow.pop %v231
    %v233 = vadd.f32 %v232, 1.0
    %v234 = vrcp.pop %v233
    %v235 = vmul.f32 1.0, %v234
    %v237 = vlaneseq
    %v238 = vshrl.u32 %v237, 7
    %v239 = vsub.s32 0, %v238
    %v240 = vrot.slane %v148, %v239
    %241 = vrot.lane.b32.xlu0 %v240, 64
    %v242 = vpop.permute.xlu0 %241
    %v244 = vadd.f32 %v226, %v242
    %246 = vrot.lane.b32.xlu0 %v244, 64
    %v247 = vpop.permute.xlu0 %246
    %v249 = vmul.f32 %v235, %v247
    %251 = vrot.lane.b32.xlu0 %v249, 64
    %v252 = vpop.permute.xlu0 %251
    %v254 = vadd.f32 %v154, %v252
    %v255 = vtanh.pop %v254
    %v256 = vsub.f32 0.0, %v255
    %258 = vrot.lane.b32.xlu0 %v256, 96
    %v259 = vpop.permute.xlu0 %258
    %v261 = vmul.f32 %v235, %v259
    %263 = vrot.lane.b32.xlu0 %v261, 32
    %v264 = vpop.permute.xlu0 %263
    %v266 = vadd.f32 %v255, %v264
    %268 = vrot.lane.b32.xlu0 %v266, 64
    %v269 = vpop.permute.xlu0 %268
    %v270 = vsel %vm155, %v269, 0
    %272 = vmatprep.subr.mxu0 0.0
    %273 = vmatpush1.msra.mxu0 %v144
    %274 = vmatprep.subr.mxu0 0.0
    %275 = vmatpush1.msra.mxu0 %v145
    %276 = vmatprep.subr.mxu0 0.0
    %277 = vmatpush1.msra.mxu0 %v146
    %278 = vmatprep.subr.mxu0 0.0
    %279 = vmatpush1.msra.mxu0 %v147
    %280 = vmatprep.subr.mxu0 0.0
    %281 = vmatpush1.msra.mxu0 0.0
    %282 = vmatprep.subr.mxu0 0.0
    %283 = vmatpush1.msra.mxu0 0.0
    %284 = vmatprep.subr.mxu0 0.0
    %285 = vmatpush1.msra.mxu0 0.0
    %286 = vmatprep.subr.mxu0 0.0
    %287 = vmatpush1.msra.mxu0 0.0
    %288 = vmatprep.subr.mxu0 0.0
    %289 = vmatpush1.msra.mxu0 0.0
    %290 = vmatprep.subr.mxu0 0.0
    %291 = vmatpush1.msra.mxu0 0.0
    %292 = vmatprep.subr.mxu0 0.0
    %293 = vmatpush1.msra.mxu0 0.0
    %294 = vmatprep.subr.mxu0 0.0
    %295 = vmatpush1.msra.mxu0 0.0
    %296 = vmatprep.subr.mxu0 0.0
    %297 = vmatpush1.msra.mxu0 0.0
    %298 = vmatprep.subr.mxu0 0.0
    %299 = vmatpush1.msra.mxu0 0.0
    %300 = vmatprep.subr.mxu0 0.0
    %301 = vmatpush1.msra.mxu0 0.0
    %302 = vmatprep.subr.mxu0 0.0
    %303 = vmatpush1.msra.mxu0 0.0
    %304 = vmatprep.subr.mxu0 0.0
    %305 = vmatpush1.msra.mxu0 0.0
    %306 = vmatprep.subr.mxu0 0.0
    %307 = vmatpush1.msra.mxu0 0.0
    %308 = vmatprep.subr.mxu0 0.0
    %309 = vmatpush1.msra.mxu0 0.0
    %310 = vmatprep.subr.mxu0 0.0
    %311 = vmatpush1.msra.mxu0 0.0
    %312 = vmatprep.subr.mxu0 0.0
    %313 = vmatpush1.msra.mxu0 0.0
    %314 = vmatprep.subr.mxu0 0.0
    %315 = vmatpush1.msra.mxu0 0.0
    %316 = vmatprep.subr.mxu0 0.0
    %317 = vmatpush1.msra.mxu0 0.0
    %318 = vmatprep.subr.mxu0 0.0
    %319 = vmatpush1.msra.mxu0 0.0
    %320 = vmatprep.subr.mxu0 0.0
    %321 = vmatpush1.msra.mxu0 0.0
    %322 = vmatprep.subr.mxu0 0.0
    %323 = vmatpush1.msra.mxu0 0.0
    %324 = vmatprep.subr.mxu0 0.0
    %325 = vmatpush1.msra.mxu0 0.0
    %326 = vmatprep.subr.mxu0 0.0
    %327 = vmatpush1.msra.mxu0 0.0
    %328 = vmatprep.subr.mxu0 0.0
    %329 = vmatpush1.msra.mxu0 0.0
    %330 = vmatprep.subr.mxu0 0.0
    %331 = vmatpush1.msra.mxu0 0.0
    %332 = vmatprep.subr.mxu0 0.0
    %333 = vmatpush1.msra.mxu0 0.0
    %334 = vmatprep.subr.mxu0 0.0
    %335 = vmatpush1.msra.mxu0 0.0
    %336 = vmatprep.mubr.f32.mxu0 0.0
    %337 = vmatmul.mubr.f32.gmra.mrb[0].mxu0 %v270
    %v338 = vpop.f32.mrb[0].mxu0
    %v339 = vadd.f32 0.0, %v338
    %v340 = vpop.f32.mrb[0].mxu0
    %341 = vdwg.mxu0
    %v343 = vrot.slane %v339, 7
    %v345 = vadd.f32 %v154, %v343
    %v346 = vxor.u32 %v345, 2147483648
    %v347 = vmul.f32 %v346, 1.442695
    %v348 = vpow.pop %v347
    %v349 = vadd.f32 %v348, 1.0
    %v350 = vrcp.pop %v349
    %v351 = vmul.f32 1.0, %v350
    %v352 = vadd.f32 %v339, %v242
    %v354 = vrot.slane %v352, 7
    %355 = vrot.lane.b32.xlu0 %v354, 64
    %v356 = vpop.permute.xlu0 %355
    %v358 = vmul.f32 %v351, %v356
    %360 = vrot.lane.b32.xlu0 %v358, 64
    %v361 = vpop.permute.xlu0 %360
    %v363 = vadd.f32 %v154, %v361
    %v364 = vtanh.pop %v363
    %v366 = vrot.slane %v364, 1
    %v368 = vsub.f32 %v266, %v366
    %v370 = vrot.slane %v368, 7
    %371 = vrot.lane.b32.xlu0 %v370, 96
    %v372 = vpop.permute.xlu0 %371
    %v374 = vmul.f32 %v351, %v372
    %376 = vrot.lane.b32.xlu0 %v374, 32
    %v377 = vpop.permute.xlu0 %376
    %v379 = vadd.f32 %v364, %v377
    %v381 = vrot.slane %v379, 1
    %382 = vrot.lane.b32.xlu0 %v381, 64
    %v383 = vpop.permute.xlu0 %382
    %v384 = vsel %vm155, %v383, 0
    %386 = vmatprep.subr.mxu0 0.0
    %387 = vmatpush1.msra.mxu0 %v144
    %388 = vmatprep.subr.mxu0 0.0
    %389 = vmatpush1.msra.mxu0 %v145
    %390 = vmatprep.subr.mxu0 0.0
    %391 = vmatpush1.msra.mxu0 %v146
    %392 = vmatprep.subr.mxu0 0.0
    %393 = vmatpush1.msra.mxu0 %v147
    %394 = vmatprep.subr.mxu0 0.0
    %395 = vmatpush1.msra.mxu0 0.0
    %396 = vmatprep.subr.mxu0 0.0
    %397 = vmatpush1.msra.mxu0 0.0
    %398 = vmatprep.subr.mxu0 0.0
    %399 = vmatpush1.msra.mxu0 0.0
    %400 = vmatprep.subr.mxu0 0.0
    %401 = vmatpush1.msra.mxu0 0.0
    %402 = vmatprep.subr.mxu0 0.0
    %403 = vmatpush1.msra.mxu0 0.0
    %404 = vmatprep.subr.mxu0 0.0
    %405 = vmatpush1.msra.mxu0 0.0
    %406 = vmatprep.subr.mxu0 0.0
    %407 = vmatpush1.msra.mxu0 0.0
    %408 = vmatprep.subr.mxu0 0.0
    %409 = vmatpush1.msra.mxu0 0.0
    %410 = vmatprep.subr.mxu0 0.0
    %411 = vmatpush1.msra.mxu0 0.0
    %412 = vmatprep.subr.mxu0 0.0
    %413 = vmatpush1.msra.mxu0 0.0
    %414 = vmatprep.subr.mxu0 0.0
    %415 = vmatpush1.msra.mxu0 0.0
    %416 = vmatprep.subr.mxu0 0.0
    %417 = vmatpush1.msra.mxu0 0.0
    %418 = vmatprep.subr.mxu0 0.0
    %419 = vmatpush1.msra.mxu0 0.0
    %420 = vmatprep.subr.mxu0 0.0
    %421 = vmatpush1.msra.mxu0 0.0
    %422 = vmatprep.subr.mxu0 0.0
    %423 = vmatpush1.msra.mxu0 0.0
    %424 = vmatprep.subr.mxu0 0.0
    %425 = vmatpush1.msra.mxu0 0.0
    %426 = vmatprep.subr.mxu0 0.0
    %427 = vmatpush1.msra.mxu0 0.0
    %428 = vmatprep.subr.mxu0 0.0
    %429 = vmatpush1.msra.mxu0 0.0
    %430 = vmatprep.subr.mxu0 0.0
    %431 = vmatpush1.msra.mxu0 0.0
    %432 = vmatprep.subr.mxu0 0.0
    %433 = vmatpush1.msra.mxu0 0.0
    %434 = vmatprep.subr.mxu0 0.0
    %435 = vmatpush1.msra.mxu0 0.0
    %436 = vmatprep.subr.mxu0 0.0
    %437 = vmatpush1.msra.mxu0 0.0
    %438 = vmatprep.subr.mxu0 0.0
    %439 = vmatpush1.msra.mxu0 0.0
    %440 = vmatprep.subr.mxu0 0.0
    %441 = vmatpush1.msra.mxu0 0.0
    %442 = vmatprep.subr.mxu0 0.0
    %443 = vmatpush1.msra.mxu0 0.0
    %444 = vmatprep.subr.mxu0 0.0
    %445 = vmatpush1.msra.mxu0 0.0
    %446 = vmatprep.subr.mxu0 0.0
    %447 = vmatpush1.msra.mxu0 0.0
    %448 = vmatprep.subr.mxu0 0.0
    %449 = vmatpush1.msra.mxu0 0.0
    %450 = vmatprep.mubr.f32.mxu0 0.0
    %451 = vmatmul.mubr.f32.gmra.mrb[0].mxu0 %v384
    %v452 = vpop.f32.mrb[0].mxu0
    %v453 = vadd.f32 0.0, %v452
    %v454 = vpop.f32.mrb[0].mxu0
    %455 = vdwg.mxu0
    %v457 = vrot.slane %v453, 6
    %v459 = vadd.f32 %v154, %v457
    %v460 = vxor.u32 %v459, 2147483648
    %v461 = vmul.f32 %v460, 1.442695
    %v462 = vpow.pop %v461
    %v463 = vadd.f32 %v462, 1.0
    %v464 = vrcp.pop %v463
    %v465 = vmul.f32 1.0, %v464
    %v466 = vadd.f32 %v453, %v242
    %v468 = vrot.slane %v466, 6
    %469 = vrot.lane.b32.xlu0 %v468, 64
    %v470 = vpop.permute.xlu0 %469
    %v472 = vmul.f32 %v465, %v470
    %474 = vrot.lane.b32.xlu0 %v472, 64
    %v475 = vpop.permute.xlu0 %474
    %v477 = vadd.f32 %v154, %v475
    %v478 = vtanh.pop %v477
    %v480 = vrot.slane %v478, 1
    %v482 = vsub.f32 %v379, %v480
    %v484 = vrot.slane %v482, 7
    %485 = vrot.lane.b32.xlu0 %v484, 96
    %v486 = vpop.permute.xlu0 %485
    %v488 = vmul.f32 %v465, %v486
    %490 = vrot.lane.b32.xlu0 %v488, 32
    %v491 = vpop.permute.xlu0 %490
    %v493 = vadd.f32 %v478, %v491
    %v495 = vrot.slane %v493, 2
    %496 = vrot.lane.b32.xlu0 %v495, 64
    %v497 = vpop.permute.xlu0 %496
    %v498 = vsel %vm155, %v497, 0
    %500 = vmatprep.subr.mxu0 0.0
    %501 = vmatpush1.msra.mxu0 %v144
    %502 = vmatprep.subr.mxu0 0.0
    %503 = vmatpush1.msra.mxu0 %v145
    %504 = vmatprep.subr.mxu0 0.0
    %505 = vmatpush1.msra.mxu0 %v146
    %506 = vmatprep.subr.mxu0 0.0
    %507 = vmatpush1.msra.mxu0 %v147
    %508 = vmatprep.subr.mxu0 0.0
    %509 = vmatpush1.msra.mxu0 0.0
    %510 = vmatprep.subr.mxu0 0.0
    %511 = vmatpush1.msra.mxu0 0.0
    %512 = vmatprep.subr.mxu0 0.0
    %513 = vmatpush1.msra.mxu0 0.0
    %514 = vmatprep.subr.mxu0 0.0
    %515 = vmatpush1.msra.mxu0 0.0
    %516 = vmatprep.subr.mxu0 0.0
    %517 = vmatpush1.msra.mxu0 0.0
    %518 = vmatprep.subr.mxu0 0.0
    %519 = vmatpush1.msra.mxu0 0.0
    %520 = vmatprep.subr.mxu0 0.0
    %521 = vmatpush1.msra.mxu0 0.0
    %522 = vmatprep.subr.mxu0 0.0
    %523 = vmatpush1.msra.mxu0 0.0
    %524 = vmatprep.subr.mxu0 0.0
    %525 = vmatpush1.msra.mxu0 0.0
    %526 = vmatprep.subr.mxu0 0.0
    %527 = vmatpush1.msra.mxu0 0.0
    %528 = vmatprep.subr.mxu0 0.0
    %529 = vmatpush1.msra.mxu0 0.0
    %530 = vmatprep.subr.mxu0 0.0
    %531 = vmatpush1.msra.mxu0 0.0
    %532 = vmatprep.subr.mxu0 0.0
    %533 = vmatpush1.msra.mxu0 0.0
    %534 = vmatprep.subr.mxu0 0.0
    %535 = vmatpush1.msra.mxu0 0.0
    %536 = vmatprep.subr.mxu0 0.0
    %537 = vmatpush1.msra.mxu0 0.0
    %538 = vmatprep.subr.mxu0 0.0
    %539 = vmatpush1.msra.mxu0 0.0
    %540 = vmatprep.subr.mxu0 0.0
    %541 = vmatpush1.msra.mxu0 0.0
    %542 = vmatprep.subr.mxu0 0.0
    %543 = vmatpush1.msra.mxu0 0.0
    %544 = vmatprep.subr.mxu0 0.0
    %545 = vmatpush1.msra.mxu0 0.0
    %546 = vmatprep.subr.mxu0 0.0
    %547 = vmatpush1.msra.mxu0 0.0
    %548 = vmatprep.subr.mxu0 0.0
    %549 = vmatpush1.msra.mxu0 0.0
    %550 = vmatprep.subr.mxu0 0.0
    %551 = vmatpush1.msra.mxu0 0.0
    %552 = vmatprep.subr.mxu0 0.0
    %553 = vmatpush1.msra.mxu0 0.0
    %554 = vmatprep.subr.mxu0 0.0
    %555 = vmatpush1.msra.mxu0 0.0
    %556 = vmatprep.subr.mxu0 0.0
    %557 = vmatpush1.msra.mxu0 0.0
    %558 = vmatprep.subr.mxu0 0.0
    %559 = vmatpush1.msra.mxu0 0.0
    %560 = vmatprep.subr.mxu0 0.0
    %561 = vmatpush1.msra.mxu0 0.0
    %562 = vmatprep.subr.mxu0 0.0
    %563 = vmatpush1.msra.mxu0 0.0
    %564 = vmatprep.mubr.f32.mxu0 0.0
    %565 = vmatmul.mubr.f32.gmra.mrb[0].mxu0 %v498
    %v566 = vpop.f32.mrb[0].mxu0
    %v567 = vadd.f32 0.0, %v566
    %v568 = vpop.f32.mrb[0].mxu0
    %569 = vdwg.mxu0
    %v571 = vrot.slane %v567, 5
    %v573 = vadd.f32 %v154, %v571
    %v574 = vxor.u32 %v573, 2147483648
    %v575 = vmul.f32 %v574, 1.442695
    %v576 = vpow.pop %v575
    %v577 = vadd.f32 %v576, 1.0
    %v578 = vrcp.pop %v577
    %v579 = vmul.f32 1.0, %v578
    %v580 = vadd.f32 %v567, %v242
    %v582 = vrot.slane %v580, 5
    %583 = vrot.lane.b32.xlu0 %v582, 64
    %v584 = vpop.permute.xlu0 %583
    %v586 = vmul.f32 %v579, %v584
    %588 = vrot.lane.b32.xlu0 %v586, 64
    %v589 = vpop.permute.xlu0 %588
    %v591 = vadd.f32 %v154, %v589
    %v592 = vtanh.pop %v591
    %v594 = vrot.slane %v592, 1
    %v596 = vsub.f32 %v493, %v594
    %v598 = vrot.slane %v596, 7
    %599 = vrot.lane.b32.xlu0 %v598, 96
    %v600 = vpop.permute.xlu0 %599
    %v602 = vmul.f32 %v579, %v600
    %604 = vrot.lane.b32.xlu0 %v602, 32
    %v605 = vpop.permute.xlu0 %604
    %v607 = vadd.f32 %v592, %v605
    %v609 = vrot.slane %v607, 3
    %610 = vrot.lane.b32.xlu0 %v609, 64
    %v611 = vpop.permute.xlu0 %610
    %v612 = vsel %vm155, %v611, 0
    %614 = vmatprep.subr.mxu0 0.0
    %615 = vmatpush1.msra.mxu0 %v144
    %616 = vmatprep.subr.mxu0 0.0
    %617 = vmatpush1.msra.mxu0 %v145
    %618 = vmatprep.subr.mxu0 0.0
    %619 = vmatpush1.msra.mxu0 %v146
    %620 = vmatprep.subr.mxu0 0.0
    %621 = vmatpush1.msra.mxu0 %v147
    %622 = vmatprep.subr.mxu0 0.0
    %623 = vmatpush1.msra.mxu0 0.0
    %624 = vmatprep.subr.mxu0 0.0
    %625 = vmatpush1.msra.mxu0 0.0
    %626 = vmatprep.subr.mxu0 0.0
    %627 = vmatpush1.msra.mxu0 0.0
    %628 = vmatprep.subr.mxu0 0.0
    %629 = vmatpush1.msra.mxu0 0.0
    %630 = vmatprep.subr.mxu0 0.0
    %631 = vmatpush1.msra.mxu0 0.0
    %632 = vmatprep.subr.mxu0 0.0
    %633 = vmatpush1.msra.mxu0 0.0
    %634 = vmatprep.subr.mxu0 0.0
    %635 = vmatpush1.msra.mxu0 0.0
    %636 = vmatprep.subr.mxu0 0.0
    %637 = vmatpush1.msra.mxu0 0.0
    %638 = vmatprep.subr.mxu0 0.0
    %639 = vmatpush1.msra.mxu0 0.0
    %640 = vmatprep.subr.mxu0 0.0
    %641 = vmatpush1.msra.mxu0 0.0
    %642 = vmatprep.subr.mxu0 0.0
    %643 = vmatpush1.msra.mxu0 0.0
    %644 = vmatprep.subr.mxu0 0.0
    %645 = vmatpush1.msra.mxu0 0.0
    %646 = vmatprep.subr.mxu0 0.0
    %647 = vmatpush1.msra.mxu0 0.0
    %648 = vmatprep.subr.mxu0 0.0
    %649 = vmatpush1.msra.mxu0 0.0
    %650 = vmatprep.subr.mxu0 0.0
    %651 = vmatpush1.msra.mxu0 0.0
    %652 = vmatprep.subr.mxu0 0.0
    %653 = vmatpush1.msra.mxu0 0.0
    %654 = vmatprep.subr.mxu0 0.0
    %655 = vmatpush1.msra.mxu0 0.0
    %656 = vmatprep.subr.mxu0 0.0
    %657 = vmatpush1.msra.mxu0 0.0
    %658 = vmatprep.subr.mxu0 0.0
    %659 = vmatpush1.msra.mxu0 0.0
    %660 = vmatprep.subr.mxu0 0.0
    %661 = vmatpush1.msra.mxu0 0.0
    %662 = vmatprep.subr.mxu0 0.0
    %663 = vmatpush1.msra.mxu0 0.0
    %664 = vmatprep.subr.mxu0 0.0
    %665 = vmatpush1.msra.mxu0 0.0
    %666 = vmatprep.subr.mxu0 0.0
    %667 = vmatpush1.msra.mxu0 0.0
    %668 = vmatprep.subr.mxu0 0.0
    %669 = vmatpush1.msra.mxu0 0.0
    %670 = vmatprep.subr.mxu0 0.0
    %671 = vmatpush1.msra.mxu0 0.0
    %672 = vmatprep.subr.mxu0 0.0
    %673 = vmatpush1.msra.mxu0 0.0
    %674 = vmatprep.subr.mxu0 0.0
    %675 = vmatpush1.msra.mxu0 0.0
    %676 = vmatprep.subr.mxu0 0.0
    %677 = vmatpush1.msra.mxu0 0.0
    %678 = vmatprep.mubr.f32.mxu0 0.0
    %679 = vmatmul.mubr.f32.gmra.mrb[0].mxu0 %v612
    %v680 = vpop.f32.mrb[0].mxu0
    %v681 = vadd.f32 0.0, %v680
    %v682 = vpop.f32.mrb[0].mxu0
    %683 = vdwg.mxu0
    %v685 = vrot.slane %v681, 4
    %v687 = vadd.f32 %v154, %v685
    %v688 = vxor.u32 %v687, 2147483648
    %v689 = vmul.f32 %v688, 1.442695
    %v690 = vpow.pop %v689
    %v691 = vadd.f32 %v690, 1.0
    %v692 = vrcp.pop %v691
    %v693 = vmul.f32 1.0, %v692
    %v694 = vadd.f32 %v681, %v242
    %v696 = vrot.slane %v694, 4
    %697 = vrot.lane.b32.xlu0 %v696, 64
    %v698 = vpop.permute.xlu0 %697
    %v700 = vmul.f32 %v693, %v698
    %702 = vrot.lane.b32.xlu0 %v700, 64
    %v703 = vpop.permute.xlu0 %702
    %v705 = vadd.f32 %v154, %v703
    %v706 = vtanh.pop %v705
    %v708 = vrot.slane %v706, 1
    %v710 = vsub.f32 %v607, %v708
    %v712 = vrot.slane %v710, 7
    %713 = vrot.lane.b32.xlu0 %v712, 96
    %v714 = vpop.permute.xlu0 %713
    %v716 = vmul.f32 %v693, %v714
    %718 = vrot.lane.b32.xlu0 %v716, 32
    %v719 = vpop.permute.xlu0 %718
    %v721 = vadd.f32 %v706, %v719
    %v723 = vrot.slane %v721, 4
    %724 = vrot.lane.b32.xlu0 %v723, 64
    %v725 = vpop.permute.xlu0 %724
    %v726 = vsel %vm155, %v725, 0
    %728 = vmatprep.subr.mxu0 0.0
    %729 = vmatpush1.msra.mxu0 %v144
    %730 = vmatprep.subr.mxu0 0.0
    %731 = vmatpush1.msra.mxu0 %v145
    %732 = vmatprep.subr.mxu0 0.0
    %733 = vmatpush1.msra.mxu0 %v146
    %734 = vmatprep.subr.mxu0 0.0
    %735 = vmatpush1.msra.mxu0 %v147
    %736 = vmatprep.subr.mxu0 0.0
    %737 = vmatpush1.msra.mxu0 0.0
    %738 = vmatprep.subr.mxu0 0.0
    %739 = vmatpush1.msra.mxu0 0.0
    %740 = vmatprep.subr.mxu0 0.0
    %741 = vmatpush1.msra.mxu0 0.0
    %742 = vmatprep.subr.mxu0 0.0
    %743 = vmatpush1.msra.mxu0 0.0
    %744 = vmatprep.subr.mxu0 0.0
    %745 = vmatpush1.msra.mxu0 0.0
    %746 = vmatprep.subr.mxu0 0.0
    %747 = vmatpush1.msra.mxu0 0.0
    %748 = vmatprep.subr.mxu0 0.0
    %749 = vmatpush1.msra.mxu0 0.0
    %750 = vmatprep.subr.mxu0 0.0
    %751 = vmatpush1.msra.mxu0 0.0
    %752 = vmatprep.subr.mxu0 0.0
    %753 = vmatpush1.msra.mxu0 0.0
    %754 = vmatprep.subr.mxu0 0.0
    %755 = vmatpush1.msra.mxu0 0.0
    %756 = vmatprep.subr.mxu0 0.0
    %757 = vmatpush1.msra.mxu0 0.0
    %758 = vmatprep.subr.mxu0 0.0
    %759 = vmatpush1.msra.mxu0 0.0
    %760 = vmatprep.subr.mxu0 0.0
    %761 = vmatpush1.msra.mxu0 0.0
    %762 = vmatprep.subr.mxu0 0.0
    %763 = vmatpush1.msra.mxu0 0.0
    %764 = vmatprep.subr.mxu0 0.0
    %765 = vmatpush1.msra.mxu0 0.0
    %766 = vmatprep.subr.mxu0 0.0
    %767 = vmatpush1.msra.mxu0 0.0
    %768 = vmatprep.subr.mxu0 0.0
    %769 = vmatpush1.msra.mxu0 0.0
    %770 = vmatprep.subr.mxu0 0.0
    %771 = vmatpush1.msra.mxu0 0.0
    %772 = vmatprep.subr.mxu0 0.0
    %773 = vmatpush1.msra.mxu0 0.0
    %774 = vmatprep.subr.mxu0 0.0
    %775 = vmatpush1.msra.mxu0 0.0
    %776 = vmatprep.subr.mxu0 0.0
    %777 = vmatpush1.msra.mxu0 0.0
    %778 = vmatprep.subr.mxu0 0.0
    %779 = vmatpush1.msra.mxu0 0.0
    %780 = vmatprep.subr.mxu0 0.0
    %781 = vmatpush1.msra.mxu0 0.0
    %782 = vmatprep.subr.mxu0 0.0
    %783 = vmatpush1.msra.mxu0 0.0
    %784 = vmatprep.subr.mxu0 0.0
    %785 = vmatpush1.msra.mxu0 0.0
    %786 = vmatprep.subr.mxu0 0.0
    %787 = vmatpush1.msra.mxu0 0.0
    %788 = vmatprep.subr.mxu0 0.0
    %789 = vmatpush1.msra.mxu0 0.0
    %790 = vmatprep.subr.mxu0 0.0
    %791 = vmatpush1.msra.mxu0 0.0
    %792 = vmatprep.mubr.f32.mxu0 0.0
    %793 = vmatmul.mubr.f32.gmra.mrb[0].mxu0 %v726
    %v794 = vpop.f32.mrb[0].mxu0
    %v795 = vadd.f32 0.0, %v794
    %v796 = vpop.f32.mrb[0].mxu0
    %797 = vdwg.mxu0
    %v799 = vrot.slane %v795, 3
    %v801 = vadd.f32 %v154, %v799
    %v802 = vxor.u32 %v801, 2147483648
    %v803 = vmul.f32 %v802, 1.442695
    %v804 = vpow.pop %v803
    %v805 = vadd.f32 %v804, 1.0
    %v806 = vrcp.pop %v805
    %v807 = vmul.f32 1.0, %v806
    %v808 = vadd.f32 %v795, %v242
    %v810 = vrot.slane %v808, 3
    %811 = vrot.lane.b32.xlu0 %v810, 64
    %v812 = vpop.permute.xlu0 %811
    %v814 = vmul.f32 %v807, %v812
    %816 = vrot.lane.b32.xlu0 %v814, 64
    %v817 = vpop.permute.xlu0 %816
    %v819 = vadd.f32 %v154, %v817
    %v820 = vtanh.pop %v819
    %v822 = vrot.slane %v820, 1
    %v824 = vsub.f32 %v721, %v822
    %v826 = vrot.slane %v824, 7
    %827 = vrot.lane.b32.xlu0 %v826, 96
    %v828 = vpop.permute.xlu0 %827
    %v830 = vmul.f32 %v807, %v828
    %832 = vrot.lane.b32.xlu0 %v830, 32
    %v833 = vpop.permute.xlu0 %832
    %v835 = vadd.f32 %v820, %v833
    %v837 = vrot.slane %v835, 5
    %838 = vrot.lane.b32.xlu0 %v837, 64
    %v839 = vpop.permute.xlu0 %838
    %v840 = vsel %vm155, %v839, 0
    %842 = vmatprep.subr.mxu0 0.0
    %843 = vmatpush1.msra.mxu0 %v144
    %844 = vmatprep.subr.mxu0 0.0
    %845 = vmatpush1.msra.mxu0 %v145
    %846 = vmatprep.subr.mxu0 0.0
    %847 = vmatpush1.msra.mxu0 %v146
    %848 = vmatprep.subr.mxu0 0.0
    %849 = vmatpush1.msra.mxu0 %v147
    %850 = vmatprep.subr.mxu0 0.0
    %851 = vmatpush1.msra.mxu0 0.0
    %852 = vmatprep.subr.mxu0 0.0
    %853 = vmatpush1.msra.mxu0 0.0
    %854 = vmatprep.subr.mxu0 0.0
    %855 = vmatpush1.msra.mxu0 0.0
    %856 = vmatprep.subr.mxu0 0.0
    %857 = vmatpush1.msra.mxu0 0.0
    %858 = vmatprep.subr.mxu0 0.0
    %859 = vmatpush1.msra.mxu0 0.0
    %860 = vmatprep.subr.mxu0 0.0
    %861 = vmatpush1.msra.mxu0 0.0
    %862 = vmatprep.subr.mxu0 0.0
    %863 = vmatpush1.msra.mxu0 0.0
    %864 = vmatprep.subr.mxu0 0.0
    %865 = vmatpush1.msra.mxu0 0.0
    %866 = vmatprep.subr.mxu0 0.0
    %867 = vmatpush1.msra.mxu0 0.0
    %868 = vmatprep.subr.mxu0 0.0
    %869 = vmatpush1.msra.mxu0 0.0
    %870 = vmatprep.subr.mxu0 0.0
    %871 = vmatpush1.msra.mxu0 0.0
    %872 = vmatprep.subr.mxu0 0.0
    %873 = vmatpush1.msra.mxu0 0.0
    %874 = vmatprep.subr.mxu0 0.0
    %875 = vmatpush1.msra.mxu0 0.0
    %876 = vmatprep.subr.mxu0 0.0
    %877 = vmatpush1.msra.mxu0 0.0
    %878 = vmatprep.subr.mxu0 0.0
    %879 = vmatpush1.msra.mxu0 0.0
    %880 = vmatprep.subr.mxu0 0.0
    %881 = vmatpush1.msra.mxu0 0.0
    %882 = vmatprep.subr.mxu0 0.0
    %883 = vmatpush1.msra.mxu0 0.0
    %884 = vmatprep.subr.mxu0 0.0
    %885 = vmatpush1.msra.mxu0 0.0
    %886 = vmatprep.subr.mxu0 0.0
    %887 = vmatpush1.msra.mxu0 0.0
    %888 = vmatprep.subr.mxu0 0.0
    %889 = vmatpush1.msra.mxu0 0.0
    %890 = vmatprep.subr.mxu0 0.0
    %891 = vmatpush1.msra.mxu0 0.0
    %892 = vmatprep.subr.mxu0 0.0
    %893 = vmatpush1.msra.mxu0 0.0
    %894 = vmatprep.subr.mxu0 0.0
    %895 = vmatpush1.msra.mxu0 0.0
    %896 = vmatprep.subr.mxu0 0.0
    %897 = vmatpush1.msra.mxu0 0.0
    %898 = vmatprep.subr.mxu0 0.0
    %899 = vmatpush1.msra.mxu0 0.0
    %900 = vmatprep.subr.mxu0 0.0
    %901 = vmatpush1.msra.mxu0 0.0
    %902 = vmatprep.subr.mxu0 0.0
    %903 = vmatpush1.msra.mxu0 0.0
    %904 = vmatprep.subr.mxu0 0.0
    %905 = vmatpush1.msra.mxu0 0.0
    %906 = vmatprep.mubr.f32.mxu0 0.0
    %907 = vmatmul.mubr.f32.gmra.mrb[0].mxu0 %v840
    %v908 = vpop.f32.mrb[0].mxu0
    %v909 = vadd.f32 0.0, %v908
    %v910 = vpop.f32.mrb[0].mxu0
    %911 = vdwg.mxu0
    %v913 = vrot.slane %v909, 2
    %v915 = vadd.f32 %v154, %v913
    %v916 = vxor.u32 %v915, 2147483648
    %v917 = vmul.f32 %v916, 1.442695
    %v918 = vpow.pop %v917
    %v919 = vadd.f32 %v918, 1.0
    %v920 = vrcp.pop %v919
    %v921 = vmul.f32 1.0, %v920
    %v922 = vadd.f32 %v909, %v242
    %v924 = vrot.slane %v922, 2
    %925 = vrot.lane.b32.xlu0 %v924, 64
    %v926 = vpop.permute.xlu0 %925
    %v928 = vmul.f32 %v921, %v926
    %930 = vrot.lane.b32.xlu0 %v928, 64
    %v931 = vpop.permute.xlu0 %930
    %v933 = vadd.f32 %v154, %v931
    %v934 = vtanh.pop %v933
    %v936 = vrot.slane %v934, 1
    %v938 = vsub.f32 %v835, %v936
    %v940 = vrot.slane %v938, 7
    %941 = vrot.lane.b32.xlu0 %v940, 96
    %v942 = vpop.permute.xlu0 %941
    %v944 = vmul.f32 %v921, %v942
    %946 = vrot.lane.b32.xlu0 %v944, 32
    %v947 = vpop.permute.xlu0 %946
    %v949 = vadd.f32 %v934, %v947
    %v951 = vrot.slane %v949, 6
    %952 = vrot.lane.b32.xlu0 %v951, 64
    %v953 = vpop.permute.xlu0 %952
    %v954 = vsel %vm155, %v953, 0
    %956 = vmatprep.subr.mxu0 0.0
    %957 = vmatpush1.msra.mxu0 %v144
    %958 = vmatprep.subr.mxu0 0.0
    %959 = vmatpush1.msra.mxu0 %v145
    %960 = vmatprep.subr.mxu0 0.0
    %961 = vmatpush1.msra.mxu0 %v146
    %962 = vmatprep.subr.mxu0 0.0
    %963 = vmatpush1.msra.mxu0 %v147
    %964 = vmatprep.subr.mxu0 0.0
    %965 = vmatpush1.msra.mxu0 0.0
    %966 = vmatprep.subr.mxu0 0.0
    %967 = vmatpush1.msra.mxu0 0.0
    %968 = vmatprep.subr.mxu0 0.0
    %969 = vmatpush1.msra.mxu0 0.0
    %970 = vmatprep.subr.mxu0 0.0
    %971 = vmatpush1.msra.mxu0 0.0
    %972 = vmatprep.subr.mxu0 0.0
    %973 = vmatpush1.msra.mxu0 0.0
    %974 = vmatprep.subr.mxu0 0.0
    %975 = vmatpush1.msra.mxu0 0.0
    %976 = vmatprep.subr.mxu0 0.0
    %977 = vmatpush1.msra.mxu0 0.0
    %978 = vmatprep.subr.mxu0 0.0
    %979 = vmatpush1.msra.mxu0 0.0
    %980 = vmatprep.subr.mxu0 0.0
    %981 = vmatpush1.msra.mxu0 0.0
    %982 = vmatprep.subr.mxu0 0.0
    %983 = vmatpush1.msra.mxu0 0.0
    %984 = vmatprep.subr.mxu0 0.0
    %985 = vmatpush1.msra.mxu0 0.0
    %986 = vmatprep.subr.mxu0 0.0
    %987 = vmatpush1.msra.mxu0 0.0
    %988 = vmatprep.subr.mxu0 0.0
    %989 = vmatpush1.msra.mxu0 0.0
    %990 = vmatprep.subr.mxu0 0.0
    %991 = vmatpush1.msra.mxu0 0.0
    %992 = vmatprep.subr.mxu0 0.0
    %993 = vmatpush1.msra.mxu0 0.0
    %994 = vmatprep.subr.mxu0 0.0
    %995 = vmatpush1.msra.mxu0 0.0
    %996 = vmatprep.subr.mxu0 0.0
    %997 = vmatpush1.msra.mxu0 0.0
    %998 = vmatprep.subr.mxu0 0.0
    %999 = vmatpush1.msra.mxu0 0.0
    %1000 = vmatprep.subr.mxu0 0.0
    %1001 = vmatpush1.msra.mxu0 0.0
    %1002 = vmatprep.subr.mxu0 0.0
    %1003 = vmatpush1.msra.mxu0 0.0
    %1004 = vmatprep.subr.mxu0 0.0
    %1005 = vmatpush1.msra.mxu0 0.0
    %1006 = vmatprep.subr.mxu0 0.0
    %1007 = vmatpush1.msra.mxu0 0.0
    %1008 = vmatprep.subr.mxu0 0.0
    %1009 = vmatpush1.msra.mxu0 0.0
    %1010 = vmatprep.subr.mxu0 0.0
    %1011 = vmatpush1.msra.mxu0 0.0
    %1012 = vmatprep.subr.mxu0 0.0
    %1013 = vmatpush1.msra.mxu0 0.0
    %1014 = vmatprep.subr.mxu0 0.0
    %1015 = vmatpush1.msra.mxu0 0.0
    %1016 = vmatprep.subr.mxu0 0.0
    %1017 = vmatpush1.msra.mxu0 0.0
    %1018 = vmatprep.subr.mxu0 0.0
    %1019 = vmatpush1.msra.mxu0 0.0
    %1020 = vmatprep.mubr.f32.mxu0 0.0
    %1021 = vmatmul.mubr.f32.gmra.mrb[0].mxu0 %v954
    %v1022 = vpop.f32.mrb[0].mxu0
    %v1023 = vadd.f32 0.0, %v1022
    %v1024 = vpop.f32.mrb[0].mxu0
    %1025 = vdwg.mxu0
    %v1027 = vrot.slane %v1023, 1
    %v1029 = vadd.f32 %v154, %v1027
    %v1030 = vxor.u32 %v1029, 2147483648
    %v1031 = vmul.f32 %v1030, 1.442695
    %v1032 = vpow.pop %v1031
    %v1033 = vadd.f32 %v1032, 1.0
    %v1034 = vrcp.pop %v1033
    %v1035 = vmul.f32 1.0, %v1034
    %v1036 = vadd.f32 %v1023, %v242
    %v1038 = vrot.slane %v1036, 1
    %1039 = vrot.lane.b32.xlu0 %v1038, 64
    %v1040 = vpop.permute.xlu0 %1039
    %v1042 = vmul.f32 %v1035, %v1040
    %1044 = vrot.lane.b32.xlu0 %v1042, 64
    %v1045 = vpop.permute.xlu0 %1044
    %v1047 = vadd.f32 %v154, %v1045
    %v1048 = vtanh.pop %v1047
    %v1050 = vrot.slane %v1048, 1
    %v1052 = vsub.f32 %v949, %v1050
    %v1054 = vrot.slane %v1052, 7
    %1055 = vrot.lane.b32.xlu0 %v1054, 96
    %v1056 = vpop.permute.xlu0 %1055
    %v1058 = vmul.f32 %v1035, %v1056
    %1060 = vrot.lane.b32.xlu0 %v1058, 32
    %v1061 = vpop.permute.xlu0 %1060
    %v1063 = vadd.f32 %v1048, %v1061
    %vm1064 = vcmask 1040384
    %v1065 = vsel %vm1064, %v266, %v379
    %vm1066 = vcmask 1041408
    %v1067 = vsel %vm1066, %v1065, %v493
    %vm1068 = vcmask 1042432
    %v1069 = vsel %vm1068, %v1067, %v607
    %v1070 = vsel %vm68, %v1069, %v721
    %vm1071 = vcmask 1044480
    %v1072 = vsel %vm1071, %v1070, %v835
    %vm1073 = vcmask 1045504
    %v1074 = vsel %vm1073, %v1072, %v949
    %vm1075 = vcmask 1046528
    %v1076 = vsel %vm1075, %v1074, %v1063
    %v1078 = vlaneseq
    %v1079 = vshrl.u32 %v1078, 7
    %v1080 = vsub.s32 0, %v1079
    %v1081 = vrot.slane %v153, %v1080
    %1084 = vrot.lane.b32.xlu0 %v1076, 64
    %v1085 = vpop.permute.xlu0 %1084
    %v1086 = vsel %vm155, %v1085, 0
    %1088 = vmatprep.subr.mxu0 0.0
    %1089 = vmatpush1.msra.mxu0 %v149
    %1090 = vmatprep.subr.mxu0 0.0
    %1091 = vmatpush1.msra.mxu0 %v150
    %1092 = vmatprep.subr.mxu0 0.0
    %1093 = vmatpush1.msra.mxu0 %v151
    %1094 = vmatprep.subr.mxu0 0.0
    %1095 = vmatpush1.msra.mxu0 %v152
    %1096 = vmatprep.subr.mxu0 0.0
    %1097 = vmatpush1.msra.mxu0 0.0
    %1098 = vmatprep.subr.mxu0 0.0
    %1099 = vmatpush1.msra.mxu0 0.0
    %1100 = vmatprep.subr.mxu0 0.0
    %1101 = vmatpush1.msra.mxu0 0.0
    %1102 = vmatprep.subr.mxu0 0.0
    %1103 = vmatpush1.msra.mxu0 0.0
    %1104 = vmatprep.subr.mxu0 0.0
    %1105 = vmatpush1.msra.mxu0 0.0
    %1106 = vmatprep.subr.mxu0 0.0
    %1107 = vmatpush1.msra.mxu0 0.0
    %1108 = vmatprep.subr.mxu0 0.0
    %1109 = vmatpush1.msra.mxu0 0.0
    %1110 = vmatprep.subr.mxu0 0.0
    %1111 = vmatpush1.msra.mxu0 0.0
    %1112 = vmatprep.subr.mxu0 0.0
    %1113 = vmatpush1.msra.mxu0 0.0
    %1114 = vmatprep.subr.mxu0 0.0
    %1115 = vmatpush1.msra.mxu0 0.0
    %1116 = vmatprep.subr.mxu0 0.0
    %1117 = vmatpush1.msra.mxu0 0.0
    %1118 = vmatprep.subr.mxu0 0.0
    %1119 = vmatpush1.msra.mxu0 0.0
    %1120 = vmatprep.subr.mxu0 0.0
    %1121 = vmatpush1.msra.mxu0 0.0
    %1122 = vmatprep.subr.mxu0 0.0
    %1123 = vmatpush1.msra.mxu0 0.0
    %1124 = vmatprep.subr.mxu0 0.0
    %1125 = vmatpush1.msra.mxu0 0.0
    %1126 = vmatprep.subr.mxu0 0.0
    %1127 = vmatpush1.msra.mxu0 0.0
    %1128 = vmatprep.subr.mxu0 0.0
    %1129 = vmatpush1.msra.mxu0 0.0
    %1130 = vmatprep.subr.mxu0 0.0
    %1131 = vmatpush1.msra.mxu0 0.0
    %1132 = vmatprep.subr.mxu0 0.0
    %1133 = vmatpush1.msra.mxu0 0.0
    %1134 = vmatprep.subr.mxu0 0.0
    %1135 = vmatpush1.msra.mxu0 0.0
    %1136 = vmatprep.subr.mxu0 0.0
    %1137 = vmatpush1.msra.mxu0 0.0
    %1138 = vmatprep.subr.mxu0 0.0
    %1139 = vmatpush1.msra.mxu0 0.0
    %1140 = vmatprep.subr.mxu0 0.0
    %1141 = vmatpush1.msra.mxu0 0.0
    %1142 = vmatprep.subr.mxu0 0.0
    %1143 = vmatpush1.msra.mxu0 0.0
    %1144 = vmatprep.subr.mxu0 0.0
    %1145 = vmatpush1.msra.mxu0 0.0
    %1146 = vmatprep.subr.mxu0 0.0
    %1147 = vmatpush1.msra.mxu0 0.0
    %1148 = vmatprep.subr.mxu0 0.0
    %1149 = vmatpush1.msra.mxu0 0.0
    %1150 = vmatprep.subr.mxu0 0.0
    %1151 = vmatpush1.msra.mxu0 0.0
    %1152 = vmatprep.mubr.f32.mxu0 0.0
    %1153 = vmatmul.mubr.f32.gmra.mrb[0].mxu0 %v1086
    %v1154 = vpop.f32.mrb[0].mxu0
    %v1155 = vadd.f32 %v1081, %v1154
    %v1156 = vpop.f32.mrb[0].mxu0
    %1157 = vdwg.mxu0
    %1158 = vmax.xlane.f32.xlu0 %v1155
    %v1159 = vpop.xlane.xlu0 %1158
    %v1160 = vsub.f32 %v1155, %v1159
    %v1161 = vmul.f32 %v1160, 1.442695
    %v1162 = vpow.pop %v1161
    %1163 = vadd.xlane.f32.xlu0 %v1162
    %v1164 = vpop.xlane.xlu0 %1163
    %v1165 = vrcp.pop %v1164
    %v1166 = vmul.f32 %v1162, %v1165
    %1167 = vst [vmem:[#allocation8] sm:$0xff] %v1166
    // Predicated region
    $region38: #{tpu_custom_call.1} parent=1 // pred_check
      _
    $region39: #{tpu_custom_call.1} parent=1 // pred_check_branch
      %1169 = sbr.rel (0) target = $region41
    $region40: #{tpu_custom_call.1} parent=1 // pred_region
      %s1171 = ssub.s32 128, 128
      %1172 = vsyncadd [#allocation5], %s1171
      %s1174 = sshll.u32 [#allocation8], 4
      %s1175 = int_to_ptr.vmem [resolvable:$true] %s1174
      %1177 = dma.vmem_to_hbm [thread:$0]  %s1175, 128, %s7, [#allocation5]
    $region41: #{tpu_custom_call.1} parent=1 // pred_fallthru
      _
    // Predicated region
    $region42: #{tpu_custom_call.1} parent=1 // pred_check
      _
    $region43: #{tpu_custom_call.1} parent=1 // pred_check_branch
      %1179 = sbr.rel (0) target = $region45
    $region44: #{tpu_custom_call.1} parent=1 // pred_region
      %1180 = dma.done [#allocation5], 128
    $region45: #{tpu_custom_call.1} parent=1 // pred_fallthru
      _
    %1181 = vsyncpa [#allocation4], 1
    %1182 = vsyncpa [#allocation7], 1
    %1183 = vsyncpa [#allocation5], 1

</llo_original>
